<compile_context>
chip_gen: v5e
topology: v5e:2x2
jax: 0.10.0
libtpu: 0.0.40
codegen_flags: <defaults>
</compile_context>

<pallas_src>
import jax
import jax.numpy as jnp
from jax.experimental import pallas as pl
from jax.experimental.pallas import tpu as pltpu


# ---------------------------------------------------------------------------
# Trace-time chip detection (host-side) to pick compute dtype / block sizes /
# dimension semantics per generation.
# ---------------------------------------------------------------------------
def _detect_chip_generation() -> int:
    try:
        kind = jax.devices()[0].device_kind.lower()
    except Exception:
        return 0
    for gen in (7, 6, 5, 4):
        if (f"v{gen}" in kind) or (f"tpu{gen}" in kind):
            return gen
    return 0


_CHIP_GEN = _detect_chip_generation()


def _compute_dtype_for(dtype):
    dt = jnp.dtype(dtype)
    # v6e/v7x have bf16 EUP/VPU: compute natively (halves EUP/VALU work and
    # vreg pressure). v5e has no bf16 EUP -> upcast to f32 there.
    if dt == jnp.dtype(jnp.bfloat16) and _CHIP_GEN >= 6:
        return dt
    if jnp.issubdtype(dt, jnp.floating):
        return jnp.dtype(jnp.float32)
    # Non-float inputs (torch.tanh requires float anyway): compute in f32.
    return jnp.dtype(jnp.float32)


def _block_config():
    """(target elements per block, vmem_limit_bytes) per generation."""
    if _CHIP_GEN >= 7:
        # 64 MiB physical VMEM: cap at ~4 MiB f32 blocks, leave headroom.
        return 1024 * 1024, 32 << 20
    if _CHIP_GEN == 6:
        # 128 MiB physical VMEM: ~8 MiB f32 blocks amortize the ~0.35 us
        # per-grid-step overhead to a few percent of wall time.
        return 2 * 1024 * 1024, 64 << 20
    # v5e / unknown: 2 MiB blocks; limit raised past the 16 MiB v5e default.
    return 512 * 1024, 48 << 20


def _dimension_semantics():
    """Returns (semantics_tuple, may_need_fallback)."""
    if _CHIP_GEN >= 7:
        core_parallel = getattr(pltpu, "CORE_PARALLEL", None)
        if core_parallel is not None:
            # Guarantee cross-TensorCore sharding of the row grid on v7x.
            return (core_parallel,), True
    return ("parallel",), False


# ---------------------------------------------------------------------------
# Kernel
# ---------------------------------------------------------------------------
def _make_kernel(compute_dtype):
    def kernel(x_ref, o_ref):
        x = x_ref[...]
        if x.dtype != compute_dtype:
            x = x.astype(compute_dtype)
        # jnp.tanh lowers to a single EUP transcendental on TPU; if a bundle
        # dump ever shows a polynomial expansion, switch to the sech^2 form
        # (one jnp.exp + pl.reciprocal(approx=True) + VPU ops).
        t = jnp.tanh(x)
        o_ref[...] = (1.0 - t * t).astype(o_ref.dtype)

    return kernel


def _tanh_prime_jnp(x, compute_dtype, out_dtype):
    t = jnp.tanh(x.astype(compute_dtype))
    return (1.0 - t * t).astype(out_dtype)


def _tanh_prime_2d(x_flat_main, compute_dtype, out_dtype):
    """Runs the Pallas kernel on a flat array whose length is a multiple of 128."""
    n = x_flat_main.size

    # Lane-dense width (multiple of 128) that divides n -> zero-copy reshape.
    W = 128
    for cand in (1024, 512, 256, 128):
        if n % cand == 0:
            W = cand
            break
    R = n // W
    x2 = x_flat_main.reshape(R, W)

    # Sublane-aligned row tile sized to the per-generation block target.
    target_elems, vmem_limit = _block_config()
    sub = {4: 8, 2: 16, 1: 32}.get(jnp.dtype(out_dtype).itemsize, 8)
    tr = max(target_elems // W, sub)
    tr = (tr // sub) * sub
    if tr >= R:
        tr = R                      # single-block fast path (block == full rows)
    grid_r = pl.cdiv(R, tr)         # partial final block is masked by Pallas

    itemsize = jnp.dtype(out_dtype).itemsize
    cost = pl.CostEstimate(
        flops=2 * n,                # mul + sub per element
        transcendentals=n,          # one tanh per element
        bytes_accessed=2 * n * itemsize,
    )

    def build(dim_sem):
        return pl.pallas_call(
            _make_kernel(compute_dtype),
            out_shape=jax.ShapeDtypeStruct((R, W), out_dtype),
            grid_spec=pltpu.PrefetchScalarGridSpec(
                num_scalar_prefetch=0,
                grid=(grid_r,),
                in_specs=[pl.BlockSpec((tr, W), lambda i: (i, 0))],
                out_specs=pl.BlockSpec((tr, W), lambda i: (i, 0)),
            ),
            compiler_params=pltpu.CompilerParams(
                dimension_semantics=dim_sem,
                vmem_limit_bytes=vmem_limit,
            ),
            cost_estimate=cost,
        )

    dim_sem, may_fallback = _dimension_semantics()
    try:
        out2 = build(dim_sem)(x2)
    except Exception:
        if not may_fallback:
            raise
        # v7x safety net: fall back to plain "parallel" if CORE_PARALLEL is
        # rejected for this grid shape.
        out2 = build(("parallel",))(x2)

    return out2.reshape(-1)


# ---------------------------------------------------------------------------
# Public wrapper (forward pass of Tanh_Prime)
# ---------------------------------------------------------------------------
def tanh_prime(x: jax.Array) -> jax.Array:
    """Elementwise tanh'(x) = 1 - tanh(x)^2, same shape/dtype as input."""
    orig_shape = x.shape
    orig_dtype = x.dtype
    n = x.size
    if n == 0:
        return x

    compute_dtype = _compute_dtype_for(orig_dtype)
    x_flat = x.reshape(-1)
    n_main = n - (n % 128)

    if n_main == 0:
        # Fewer than 128 elements total: a kernel launch is not worth it.
        return _tanh_prime_jnp(x_flat, compute_dtype, orig_dtype).reshape(orig_shape)

    if n_main == n:
        # Common path: size divisible by 128 -> zero-copy reshape; no pad, no slice.
        out_flat = _tanh_prime_2d(x_flat, compute_dtype, orig_dtype)
        return out_flat.reshape(orig_shape)

    # Ragged path: kernel on the 128-aligned bulk, tiny jnp op for the
    # <=127-element tail; never materialize a padded/sliced copy of the tensor.
    out_main = _tanh_prime_2d(x_flat[:n_main], compute_dtype, orig_dtype)
    out_tail = _tanh_prime_jnp(x_flat[n_main:], compute_dtype, orig_dtype)
    return jnp.concatenate([out_main, out_tail]).reshape(orig_shape)


class TanhPrime:
    """Thin module-style wrapper mirroring the PyTorch nn.Module."""

    def __call__(self, x: jax.Array) -> jax.Array:
        return tanh_prime(x)


if __name__ == "__main__":
    key = jax.random.PRNGKey(0)
    # Input: (N, *) — use (2, 4, 16, 16) like an NCHW activation tensor.
    x = jax.random.normal(key, (2, 4, 16, 16), dtype=jnp.float32)

    m = TanhPrime()
    y = m(x)
    y = jax.block_until_ready(y)

    # Correctness check against plain-JAX reference.
    t = jnp.tanh(x)
    ref = 1.0 - t * t
    assert y.shape == x.shape and y.dtype == x.dtype
    assert jnp.allclose(y, ref, atol=1e-6, rtol=1e-6)

    print("KERNEL_OK")
</pallas_src>

<mosaic_0001>
module attributes {stable_mosaic.version = 11 : i64} {
  func.func @kernel(%arg0: i32, %arg1: memref<2x1024xf32, #tpu.memory_space<vmem>>, %arg2: memref<2x1024xf32, #tpu.memory_space<vmem>>) attributes {dimension_semantics = [#tpu.dimension_semantics<parallel>], iteration_bounds = array<i64: 1>, scalar_prefetch = 0 : i64, scratch_operands = 0 : i64, tpu.core_type = #tpu.core_type<tc>, window_params = [{transform_indices = @transform_0, window_bounds = array<i64: 2, 1024>}, {transform_indices = @transform_1, window_bounds = array<i64: 2, 1024>}]} {
    %c0 = arith.constant 0 : index
    %c0_0 = arith.constant 0 : index
    %0 = vector.load %arg1[%c0, %c0_0] : memref<2x1024xf32, #tpu.memory_space<vmem>>, vector<2x1024xf32>
    %1 = math.tanh %0 : vector<2x1024xf32>
    %2 = arith.mulf %1, %1 : vector<2x1024xf32>
    %cst = arith.constant 1.000000e+00 : f32
    %3 = vector.broadcast %cst : f32 to vector<2x1024xf32>
    %4 = arith.subf %3, %2 : vector<2x1024xf32>
    %c0_1 = arith.constant 0 : index
    %c0_2 = arith.constant 0 : index
    %5 = vector.load %arg2[%c0_1, %c0_2] : memref<2x1024xf32, #tpu.memory_space<vmem>>, vector<2x1024xf32>
    tpu.vector_store %arg2[%c0_1, %c0_2], %4 {strides = array<i32>} : memref<2x1024xf32, #tpu.memory_space<vmem>>, vector<2x1024xf32>,
    return
  }
  func.func @transform_0(%arg0: i32) -> (i32, i32) {
    %c0_i32 = arith.constant 0 : i32
    %c0_i32_0 = arith.constant 0 : i32
    return %arg0, %c0_i32 : i32, i32
  }
  func.func @transform_1(%arg0: i32) -> (i32, i32) {
    %c0_i32 = arith.constant 0 : i32
    %c0_i32_0 = arith.constant 0 : i32
    return %arg0, %c0_i32 : i32, i32
  }
}

</mosaic_0001>

<llo_original>
// kernel: tpu_custom_call.1
$region0: #{tpu_custom_call.1}
  #allocation0 [shape = 'u32[]', space=smem, size = 0x4, offset = 0x4, fixed_abs, tag = 'smem constant byte address 0x4 - core index']
  #allocation1 [shape = 'u32[72,128]{1,0:T(1,128)}', space=vmem, size = 0x9000, scoped, tag = 'internal scratch']
  %s0 = inlined_call_operand.hbm [shape: f32[2,1024], index: 0, kind: input, shape index: {}]
  %s1 = inlined_call_operand.hbm [shape: f32[2,1024], index: 1, kind: output, shape index: {}]
  %s2 = sld [smem:[#allocation0]]
  $region18: #{tpu_custom_call.1} parent=0
    _
  %s4 = ssub.s32 1, %s2
  %s5 = scalar_select 0, %s4, %s2
  $region1: #{tpu_custom_call.1} parent=0
    #allocation2 [shape = 'u8[8192]{0}', space=vmem, size = 0x2000, scoped, tag = 'input window, operand 0, single buffered']
    #allocation3 [shape = 's32[1]{0}', space=sflag, size = 0x4, scoped, tag = 'scoped memory for tpu_custom_call.1']
    #allocation4 [shape = 's32[1]{0}', space=sflag, size = 0x4, scoped, tag = 'scoped memory for tpu_custom_call.1']
    #allocation5 [shape = 'u8[8192]{0}', space=vmem, size = 0x2000, scoped, tag = 'output window, operand 0, single buffered']
    %6 = vsyncpa [#allocation3], 0
    %7 = vsyncpa [#allocation4], 0
    // Predicated region
    $region2: #{tpu_custom_call.1} parent=1 // pred_check
      _
    $region3: #{tpu_custom_call.1} parent=1 // pred_check_branch
      %9 = sbr.rel (0) target = $region5
    $region4: #{tpu_custom_call.1} parent=1 // pred_region
      %11 = vsyncadd [#allocation3], 0
      %s13 = sshll.u32 %s0, 4
      %s14 = int_to_ptr.hbm [resolvable:$true] %s13
      %s15 = sshll.u32 [#allocation2], 4
      %s16 = int_to_ptr.vmem [resolvable:$true] %s15
      %18 = dma.hbm_to_vmem [thread:$0]  %s14, 256, %s16, [#allocation3]
    $region5: #{tpu_custom_call.1} parent=1 // pred_fallthru
      _
    // Predicated region
    $region6: #{tpu_custom_call.1} parent=1 // pred_check
      _
    $region7: #{tpu_custom_call.1} parent=1 // pred_check_branch
      %20 = sbr.rel (0) target = $region9
    $region8: #{tpu_custom_call.1} parent=1 // pred_region
      %22 = dma.done [#allocation3], 256
    $region9: #{tpu_custom_call.1} parent=1 // pred_fallthru
      _
    %v23 = vld [vmem:[#allocation2] sm:$0xff]
    %v24 = vld [vmem:[#allocation2 + $0x8] sm:$0xff]
    %v25 = vtanh.pop %v23
    %v26 = vtanh.pop %v24
    %v27 = vmul.f32 %v25, %v25
    %v28 = vmul.f32 %v26, %v26
    %v29 = vsub.f32 1.0, %v27
    %v30 = vsub.f32 1.0, %v28
    %31 = vst [vmem:[#allocation5] sm:$0xff] %v29
    %32 = vst [vmem:[#allocation5 + $0x8] sm:$0xff] %v30
    // Predicated region
    $region10: #{tpu_custom_call.1} parent=1 // pred_check
      _
    $region11: #{tpu_custom_call.1} parent=1 // pred_check_branch
      %34 = sbr.rel (0) target = $region13
    $region12: #{tpu_custom_call.1} parent=1 // pred_region
      %36 = vsyncadd [#allocation4], 0
      %s38 = sshll.u32 [#allocation5], 4
      %s39 = int_to_ptr.vmem [resolvable:$true] %s38
      %s40 = sshll.u32 %s1, 4
      %s41 = int_to_ptr.hbm [resolvable:$true] %s40
      %43 = dma.vmem_to_hbm [thread:$0]  %s39, 256, %s41, [#allocation4]
    $region13: #{tpu_custom_call.1} parent=1 // pred_fallthru
      _
    // Predicated region
    $region14: #{tpu_custom_call.1} parent=1 // pred_check
      _
    $region15: #{tpu_custom_call.1} parent=1 // pred_check_branch
      %45 = sbr.rel (0) target = $region17
    $region16: #{tpu_custom_call.1} parent=1 // pred_region
      %47 = dma.done [#allocation4], 256
    $region17: #{tpu_custom_call.1} parent=1 // pred_fallthru
      _
    %48 = vsyncpa [#allocation3], 1
    %49 = vsyncpa [#allocation4], 1

</llo_original>
